<compile_context>
chip_gen: v6e
topology: v6e:2x2x1
jax: 0.10.0
libtpu: 0.0.40
codegen_flags: <defaults>
</compile_context>

<pallas_src>
import jax
import jax.numpy as jnp
import numpy as np
from jax.experimental import pallas as pl
from jax.experimental.pallas import tpu as pltpu

EPS = 1e-5
KH = KW = 3


def _make_kernel(N, Ho, Wo, Cout):
    LP = Wo * Cout                        # packed output lane width (128 for the toy shape)
    inv_cnt = 1.0 / float(N * Ho * Wo)    # BatchNorm normalizer (biased variance)

    def kernel(x_ref, w_ref, gsum_ref, gamma_ref, beta_ref, out_ref):
        # One fused MXU matmul: LHS (N*Ho, 3*Wp*Cin) x block-Toeplitz weight
        # (3*Wp*Cin, 2*LP) -> [ y_packed | shortcut_packed ], lanes = wo*Cout + co.
        yall = jnp.dot(x_ref[...], w_ref[...], preferred_element_type=jnp.float32)
        yp = yall[:, :LP]                 # main branch, pre-BN
        sc = yall[:, LP:]                 # 1x1-conv shortcut

        # ---- BatchNorm statistics (computed once, straight-line) ----
        # Per-lane sums -> per-channel totals broadcast back to all wo groups via
        # the group-sum matmul (avoids lane<->sublane reshapes).
        sum_lane = jnp.sum(yp, axis=0, keepdims=True)                       # (1, LP)
        mean_lane = jnp.dot(sum_lane, gsum_ref[...],
                            preferred_element_type=jnp.float32) * inv_cnt
        d = yp - mean_lane                                                  # centered pass
        ssq_lane = jnp.sum(d * d, axis=0, keepdims=True)                    # (1, LP)
        var_lane = jnp.dot(ssq_lane, gsum_ref[...],
                           preferred_element_type=jnp.float32) * inv_cnt
        inv_std = jax.lax.rsqrt(var_lane + EPS)

        # Fused affine: single FMA + ReLU + residual add.
        scale = inv_std * gamma_ref[...]
        bias = beta_ref[...] - mean_lane * scale
        out_ref[...] = (jnp.maximum(yp * scale + bias, 0.0) + sc).astype(out_ref.dtype)

    return kernel


def _build_fused_weight(dw_np, pw_np, sc_np, Wp, Wo, Cin, Cout):
    """Merged block-Toeplitz weight: (3*Wp*Cin, 2*Wo*Cout).

    Row block kh (size Wp*Cin) multiplies padded input row ho+kh (channels on lanes).
    Columns [0, Wo*Cout)        : depthwise3x3 * pointwise1x1 (fused conv).
    Columns [Wo*Cout, 2*Wo*Cout): 1x1 shortcut (center tap kh=1, kw=1 only).
    """
    LP = Wo * Cout
    Kblk = Wp * Cin
    w = np.zeros((KH * Kblk, 2 * LP), np.float32)
    for kh in range(KH):
        base = kh * Kblk
        for kw in range(KW):
            fk = dw_np[kh, kw][:, None] * pw_np            # (Cin, Cout)
            for wo in range(Wo):
                r0 = base + (wo + kw) * Cin
                c0 = wo * Cout
                w[r0:r0 + Cin, c0:c0 + Cout] += fk
    base = 1 * Kblk                                        # shortcut: original pixel (ho, wo)
    for wo in range(Wo):
        r0 = base + (wo + 1) * Cin
        c0 = LP + wo * Cout
        w[r0:r0 + Cin, c0:c0 + Cout] += sc_np
    return w


def residual_block(x_nchw, dw_w, pw_w, gamma, beta, sc_w):
    """x_nchw: (N, Cin, H, W) f32.  Returns (N, Cout, H, W) f32."""
    N, Cin, H, W = x_nchw.shape
    Cout = pw_w.shape[1]
    Ho, Wo = H, W
    Hp, Wp = H + 2, W + 2
    LP = Wo * Cout
    K3 = KH * Wp * Cin
    M = N * Ho

    # ---- wrapper-side layout plumbing (no compute) ----
    x_nhwc = jnp.transpose(x_nchw, (0, 2, 3, 1))
    xpad = jnp.pad(x_nhwc, ((0, 0), (1, 1), (1, 1), (0, 0)))          # 1-px halo
    xpk = xpad.reshape(N, Hp, Wp * Cin)                               # channels folded on lanes
    # Row-stack all images and the three shifted row views -> single matmul LHS.
    x_st = jnp.concatenate(
        [xpk[:, 0:Ho, :], xpk[:, 1:1 + Ho, :], xpk[:, 2:2 + Ho, :]], axis=-1
    ).reshape(M, K3)

    w_fused = jnp.asarray(
        _build_fused_weight(np.asarray(dw_w), np.asarray(pw_w), np.asarray(sc_w),
                            Wp, Wo, Cin, Cout))
    # group-sum matrix: lane (wo,co) -> per-channel total broadcast back to all wo groups
    gsum = jnp.asarray(np.kron(np.ones((Wo, Wo), np.float32),
                               np.eye(Cout, dtype=np.float32)))       # (LP, LP)
    gamma_lane = jnp.tile(gamma.reshape(1, Cout), (1, Wo))            # (1, LP)
    beta_lane = jnp.tile(beta.reshape(1, Cout), (1, Wo))              # (1, LP)

    kernel = _make_kernel(N, Ho, Wo, Cout)

    out_pk = pl.pallas_call(
        kernel,
        out_shape=jax.ShapeDtypeStruct((M, LP), jnp.float32),
        grid=(1,),                                                     # single step; whole batch resident
        in_specs=[
            pl.BlockSpec((M, K3), lambda i: (0, 0)),                   # stacked LHS (32, 216)
            pl.BlockSpec((K3, 2 * LP), lambda i: (0, 0)),              # fused block-Toeplitz weights
            pl.BlockSpec((LP, LP), lambda i: (0, 0)),                  # group-sum matrix
            pl.BlockSpec((1, LP), lambda i: (0, 0)),                   # gamma (lane-packed)
            pl.BlockSpec((1, LP), lambda i: (0, 0)),                   # beta  (lane-packed)
        ],
        out_specs=pl.BlockSpec((M, LP), lambda i: (0, 0)),
        compiler_params=pltpu.CompilerParams(
            dimension_semantics=("arbitrary",),
            vmem_limit_bytes=8 * 1024 * 1024),                         # working set < 0.4 MiB
    )(x_st, w_fused, gsum, gamma_lane, beta_lane)

    # unpack lanes: (N*Ho, Wo*Cout) -> (N, Cout, Ho, Wo)
    return jnp.transpose(out_pk.reshape(N, Ho, Wo, Cout), (0, 3, 1, 2))


def ref_forward(x_nchw, dw_w, pw_w, gamma, beta, sc_w):
    """Pure-JAX reference mirroring the PyTorch forward (training-mode BN)."""
    N, Cin, H, W = x_nchw.shape
    x = jnp.transpose(x_nchw, (0, 2, 3, 1))
    dw_hwio = dw_w.reshape(KH, KW, 1, Cin)        # grouped-conv kernel, groups = Cin
    y = jax.lax.conv_general_dilated(
        x, dw_hwio, window_strides=(1, 1), padding=((1, 1), (1, 1)),
        dimension_numbers=("NHWC", "HWIO", "NHWC"), feature_group_count=Cin)
    y = jnp.einsum("nhwc,cd->nhwd", y, pw_w)
    mean = jnp.mean(y, axis=(0, 1, 2))
    var = jnp.mean((y - mean) ** 2, axis=(0, 1, 2))
    y = (y - mean) / jnp.sqrt(var + EPS) * gamma + beta
    y = jnp.maximum(y, 0.0)
    sc = jnp.einsum("nhwc,cd->nhwd", x, sc_w)
    return jnp.transpose(y + sc, (0, 3, 1, 2))


if __name__ == "__main__":
    N, Cin, H, W, Cout = 2, 4, 16, 16, 8          # ResidualBlock(4, 8, downsample=False)

    key = jax.random.PRNGKey(0)
    k = jax.random.split(key, 6)
    x = jax.random.normal(k[0], (N, Cin, H, W), jnp.float32)
    dw_w = 0.2 * jax.random.normal(k[1], (KH, KW, Cin), jnp.float32)   # depthwise 3x3 (per-channel)
    pw_w = 0.2 * jax.random.normal(k[2], (Cin, Cout), jnp.float32)     # pointwise 1x1
    gamma = 1.0 + 0.1 * jax.random.normal(k[3], (Cout,), jnp.float32)  # BN weight
    beta = 0.1 * jax.random.normal(k[4], (Cout,), jnp.float32)         # BN bias
    sc_w = 0.2 * jax.random.normal(k[5], (Cin, Cout), jnp.float32)     # shortcut 1x1

    out = residual_block(x, dw_w, pw_w, gamma, beta, sc_w)
    jax.block_until_ready(out)

    ref = ref_forward(x, dw_w, pw_w, gamma, beta, sc_w)
    np.testing.assert_allclose(np.asarray(out), np.asarray(ref), rtol=2e-3, atol=2e-3)

    print("KERNEL_OK")
</pallas_src>

<mosaic_0001>
module attributes {stable_mosaic.version = 11 : i64} {
  func.func @kernel(%arg0: i32, %arg1: memref<32x216xf32, #tpu.memory_space<vmem>>, %arg2: memref<216x256xf32, #tpu.memory_space<vmem>>, %arg3: memref<128x128xf32, #tpu.memory_space<vmem>>, %arg4: memref<1x128xf32, #tpu.memory_space<vmem>>, %arg5: memref<1x128xf32, #tpu.memory_space<vmem>>, %arg6: memref<32x128xf32, #tpu.memory_space<vmem>>) attributes {dimension_semantics = [#tpu.dimension_semantics<arbitrary>], iteration_bounds = array<i64: 1>, scalar_prefetch = 0 : i64, scratch_operands = 0 : i64, tpu.core_type = #tpu.core_type<tc>, window_params = [{pipeline_mode = #tpu.pipeline_mode<synchronous>, transform_indices = @transform_0, window_bounds = array<i64: 32, 216>}, {pipeline_mode = #tpu.pipeline_mode<synchronous>, transform_indices = @transform_1, window_bounds = array<i64: 216, 256>}, {pipeline_mode = #tpu.pipeline_mode<synchronous>, transform_indices = @transform_2, window_bounds = array<i64: 128, 128>}, {pipeline_mode = #tpu.pipeline_mode<synchronous>, transform_indices = @transform_3, window_bounds = array<i64: 1, 128>}, {pipeline_mode = #tpu.pipeline_mode<synchronous>, transform_indices = @transform_4, window_bounds = array<i64: 1, 128>}, {pipeline_mode = #tpu.pipeline_mode<synchronous>, transform_indices = @transform_5, window_bounds = array<i64: 32, 128>}]} {
    %c0 = arith.constant 0 : index
    %c0_0 = arith.constant 0 : index
    %0 = vector.load %arg1[%c0, %c0_0] : memref<32x216xf32, #tpu.memory_space<vmem>>, vector<32x216xf32>
    %c0_1 = arith.constant 0 : index
    %c0_2 = arith.constant 0 : index
    %1 = vector.load %arg2[%c0_1, %c0_2] : memref<216x256xf32, #tpu.memory_space<vmem>>, vector<216x256xf32>
    %cst = arith.constant dense<0.000000e+00> : vector<32x256xf32>
    %2 = tpu.matmul %0, %1, %cst {dimension_numbers = #tpu.dot_dimension_numbers<[1], [0], [0], [1], [0, 0, 1, 1], [], []>} : vector<32x216xf32>, vector<216x256xf32>, vector<32x256xf32> -> vector<32x256xf32>
    %3 = vector.extract_strided_slice %2 {offsets = [0, 0], sizes = [32, 128], strides = [1, 1]} : vector<32x256xf32> to vector<32x128xf32>
    %4 = vector.extract_strided_slice %2 {offsets = [0, 128], sizes = [32, 128], strides = [1, 1]} : vector<32x256xf32> to vector<32x128xf32>
    %cst_3 = arith.constant dense<0.000000e+00> : vector<128xf32>
    %5 = vector.multi_reduction <add>, %3, %cst_3 [0] : vector<32x128xf32> to vector<128xf32>
    %6 = vector.shape_cast %5 : vector<128xf32> to vector<1x128xf32>
    %c0_4 = arith.constant 0 : index
    %c0_5 = arith.constant 0 : index
    %7 = vector.load %arg3[%c0_4, %c0_5] : memref<128x128xf32, #tpu.memory_space<vmem>>, vector<128x128xf32>
    %cst_6 = arith.constant dense<0.000000e+00> : vector<1x128xf32>
    %8 = tpu.matmul %6, %7, %cst_6 {dimension_numbers = #tpu.dot_dimension_numbers<[1], [0], [0], [1], [0, 0, 1, 1], [], []>} : vector<1x128xf32>, vector<128x128xf32>, vector<1x128xf32> -> vector<1x128xf32>
    %cst_7 = arith.constant 0.001953125 : f32
    %9 = vector.broadcast %cst_7 : f32 to vector<1x128xf32>
    %10 = arith.mulf %8, %9 : vector<1x128xf32>
    %11 = vector.broadcast %10 : vector<1x128xf32> to vector<32x128xf32>
    %12 = arith.subf %3, %11 : vector<32x128xf32>
    %13 = arith.mulf %12, %12 : vector<32x128xf32>
    %cst_8 = arith.constant dense<0.000000e+00> : vector<128xf32>
    %14 = vector.multi_reduction <add>, %13, %cst_8 [0] : vector<32x128xf32> to vector<128xf32>
    %15 = vector.shape_cast %14 : vector<128xf32> to vector<1x128xf32>
    %c0_9 = arith.constant 0 : index
    %c0_10 = arith.constant 0 : index
    %16 = vector.load %arg3[%c0_9, %c0_10] : memref<128x128xf32, #tpu.memory_space<vmem>>, vector<128x128xf32>
    %cst_11 = arith.constant dense<0.000000e+00> : vector<1x128xf32>
    %17 = tpu.matmul %15, %16, %cst_11 {dimension_numbers = #tpu.dot_dimension_numbers<[1], [0], [0], [1], [0, 0, 1, 1], [], []>} : vector<1x128xf32>, vector<128x128xf32>, vector<1x128xf32> -> vector<1x128xf32>
    %cst_12 = arith.constant 0.001953125 : f32
    %18 = vector.broadcast %cst_12 : f32 to vector<1x128xf32>
    %19 = arith.mulf %17, %18 : vector<1x128xf32>
    %cst_13 = arith.constant 9.99999974E-6 : f32
    %20 = vector.broadcast %cst_13 : f32 to vector<1x128xf32>
    %21 = arith.addf %19, %20 : vector<1x128xf32>
    %22 = math.rsqrt %21 : vector<1x128xf32>
    %c0_14 = arith.constant 0 : index
    %c0_15 = arith.constant 0 : index
    %23 = vector.load %arg4[%c0_14, %c0_15] : memref<1x128xf32, #tpu.memory_space<vmem>>, vector<1x128xf32>
    %24 = arith.mulf %22, %23 : vector<1x128xf32>
    %c0_16 = arith.constant 0 : index
    %c0_17 = arith.constant 0 : index
    %25 = vector.load %arg5[%c0_16, %c0_17] : memref<1x128xf32, #tpu.memory_space<vmem>>, vector<1x128xf32>
    %26 = arith.mulf %10, %24 : vector<1x128xf32>
    %27 = arith.subf %25, %26 : vector<1x128xf32>
    %28 = vector.broadcast %24 : vector<1x128xf32> to vector<32x128xf32>
    %29 = arith.mulf %3, %28 : vector<32x128xf32>
    %30 = vector.broadcast %27 : vector<1x128xf32> to vector<32x128xf32>
    %31 = arith.addf %29, %30 : vector<32x128xf32>
    %cst_18 = arith.constant 0.000000e+00 : f32
    %32 = vector.broadcast %cst_18 : f32 to vector<32x128xf32>
    %33 = arith.maximumf %31, %32 : vector<32x128xf32>
    %34 = arith.addf %33, %4 : vector<32x128xf32>
    %c0_19 = arith.constant 0 : index
    %c0_20 = arith.constant 0 : index
    %35 = vector.load %arg6[%c0_19, %c0_20] : memref<32x128xf32, #tpu.memory_space<vmem>>, vector<32x128xf32>
    tpu.vector_store %arg6[%c0_19, %c0_20], %34 {strides = array<i32>} : memref<32x128xf32, #tpu.memory_space<vmem>>, vector<32x128xf32>,
    return
  }
  func.func @transform_0(%arg0: i32) -> (i32, i32) {
    %c0_i32 = arith.constant 0 : i32
    %c0_i32_0 = arith.constant 0 : i32
    %c0_i32_1 = arith.constant 0 : i32
    return %c0_i32, %c0_i32_0 : i32, i32
  }
  func.func @transform_1(%arg0: i32) -> (i32, i32) {
    %c0_i32 = arith.constant 0 : i32
    %c0_i32_0 = arith.constant 0 : i32
    %c0_i32_1 = arith.constant 0 : i32
    return %c0_i32, %c0_i32_0 : i32, i32
  }
  func.func @transform_2(%arg0: i32) -> (i32, i32) {
    %c0_i32 = arith.constant 0 : i32
    %c0_i32_0 = arith.constant 0 : i32
    %c0_i32_1 = arith.constant 0 : i32
    return %c0_i32, %c0_i32_0 : i32, i32
  }
  func.func @transform_3(%arg0: i32) -> (i32, i32) {
    %c0_i32 = arith.constant 0 : i32
    %c0_i32_0 = arith.constant 0 : i32
    %c0_i32_1 = arith.constant 0 : i32
    return %c0_i32, %c0_i32_0 : i32, i32
  }
  func.func @transform_4(%arg0: i32) -> (i32, i32) {
    %c0_i32 = arith.constant 0 : i32
    %c0_i32_0 = arith.constant 0 : i32
    %c0_i32_1 = arith.constant 0 : i32
    return %c0_i32, %c0_i32_0 : i32, i32
  }
  func.func @transform_5(%arg0: i32) -> (i32, i32) {
    %c0_i32 = arith.constant 0 : i32
    %c0_i32_0 = arith.constant 0 : i32
    %c0_i32_1 = arith.constant 0 : i32
    return %c0_i32, %c0_i32_0 : i32, i32
  }
}

</mosaic_0001>

<llo_original>
// kernel: tpu_custom_call.1
$region0: #{tpu_custom_call.1}
  #allocation0 [shape = 'u32[]', space=smem, size = 0x4, offset = 0x4, fixed_abs, tag = 'smem constant byte address 0x4 - core index']
  #allocation1 [shape = 'u32[144,128]{1,0:T(1,128)}', space=vmem, size = 0x12000, scoped, tag = 'internal scratch']
  %s0 = inlined_call_operand.hbm [shape: f32[32,216], index: 0, kind: input, shape index: {}]
  %s1 = inlined_call_operand.hbm [shape: f32[216,256], index: 1, kind: input, shape index: {}]
  %s2 = inlined_call_operand.hbm [shape: f32[128,128], index: 2, kind: input, shape index: {}]
  %s3 = inlined_call_operand.vmem [shape: f32[1,128], index: 3, kind: input, shape index: {}]
  %s4 = inlined_call_operand.vmem [shape: f32[1,128], index: 4, kind: input, shape index: {}]
  %s5 = inlined_call_operand.hbm [shape: f32[32,128], index: 5, kind: output, shape index: {}]
  %s6 = sld [smem:[#allocation0]]
  $region42: #{tpu_custom_call.1} parent=0
    _
  %s8 = ssub.s32 1, %s6
  %s9 = scalar_select 0, %s8, %s6
  $region1: #{tpu_custom_call.1} parent=0
    #allocation2 [shape = 'u8[32768]{0}', space=vmem, size = 0x8000, scoped, tag = 'input window, operand 0, single buffered']
    #allocation3 [shape = 's32[1]{0}', space=sflag, size = 0x4, scoped, tag = 'scoped memory for tpu_custom_call.1']
    #allocation4 [shape = 's32[1]{0}', space=sflag, size = 0x4, scoped, tag = 'scoped memory for tpu_custom_call.1']
    #allocation5 [shape = 'u8[221184]{0}', space=vmem, size = 0x36000, scoped, tag = 'input window, operand 1, single buffered']
    #allocation6 [shape = 's32[1]{0}', space=sflag, size = 0x4, scoped, tag = 'scoped memory for tpu_custom_call.1']
    #allocation7 [shape = 'u8[65536]{0}', space=vmem, size = 0x10000, scoped, tag = 'input window, operand 2, single buffered']
    #allocation8 [shape = 'u8[16384]{0}', space=vmem, size = 0x4000, scoped, tag = 'output window, operand 0, single buffered']
    %10 = vsyncpa [#allocation3], 0
    %11 = vsyncpa [#allocation6], 0
    %12 = vsyncpa [#allocation4], 0
    // Predicated region
    $region2: #{tpu_custom_call.1} parent=1 // pred_check
      _
    $region3: #{tpu_custom_call.1} parent=1 // pred_check_branch
      %14 = sbr.rel (0) target = $region5
    $region4: #{tpu_custom_call.1} parent=1 // pred_region
      %s16 = ssub.s32 1024, 1024
      %17 = vsyncadd [#allocation3], %s16
      %s18 = sshll.u32 [#allocation2], 4
      %s19 = int_to_ptr.vmem [resolvable:$true] %s18
      %24 = dma.hbm_to_vmem [thread:$0]  %s0, 1024, %s19, [#allocation3], 256, 256, 16
    $region5: #{tpu_custom_call.1} parent=1 // pred_fallthru
      _
    // Predicated region
    $region6: #{tpu_custom_call.1} parent=1 // pred_check
      _
    $region7: #{tpu_custom_call.1} parent=1 // pred_check_branch
      %26 = sbr.rel (0) target = $region9
    $region8: #{tpu_custom_call.1} parent=1 // pred_region
      %s28 = ssub.s32 6912, 6912
      %29 = vsyncadd [#allocation6], %s28
      %s30 = sshll.u32 [#allocation5], 4
      %s31 = int_to_ptr.vmem [resolvable:$true] %s30
      %36 = dma.hbm_to_vmem [thread:$0]  %s1, 6912, %s31, [#allocation6], 256, 256, 16
    $region9: #{tpu_custom_call.1} parent=1 // pred_fallthru
      _
    // Predicated region
    $region10: #{tpu_custom_call.1} parent=1 // pred_check
      _
    $region11: #{tpu_custom_call.1} parent=1 // pred_check_branch
      %38 = sbr.rel (0) target = $region13
    $region12: #{tpu_custom_call.1} parent=1 // pred_region
      %s40 = ssub.s32 2048, 2048
      %41 = vsyncadd [#allocation6], %s40
      %s42 = sshll.u32 [#allocation7], 4
      %s43 = int_to_ptr.vmem [resolvable:$true] %s42
      %48 = dma.hbm_to_vmem [thread:$0]  %s2, 2048, %s43, [#allocation6], 128, 128, 8
    $region13: #{tpu_custom_call.1} parent=1 // pred_fallthru
      _
    // Predicated region
    $region14: #{tpu_custom_call.1} parent=1 // pred_check
      _
    $region15: #{tpu_custom_call.1} parent=1 // pred_check_branch
      %50 = sbr.rel (0) target = $region17
    $region16: #{tpu_custom_call.1} parent=1 // pred_region
      _
    $region17: #{tpu_custom_call.1} parent=1 // pred_fallthru
      _
    // Predicated region
    $region18: #{tpu_custom_call.1} parent=1 // pred_check
      _
    $region19: #{tpu_custom_call.1} parent=1 // pred_check_branch
      %52 = sbr.rel (0) target = $region21
    $region20: #{tpu_custom_call.1} parent=1 // pred_region
      _
    $region21: #{tpu_custom_call.1} parent=1 // pred_fallthru
      _
    // Predicated region
    $region22: #{tpu_custom_call.1} parent=1 // pred_check
      _
    $region23: #{tpu_custom_call.1} parent=1 // pred_check_branch
      %54 = sbr.rel (0) target = $region25
    $region24: #{tpu_custom_call.1} parent=1 // pred_region
      %55 = dma.done [#allocation3], 1024
    $region25: #{tpu_custom_call.1} parent=1 // pred_fallthru
      _
    // Predicated region
    $region26: #{tpu_custom_call.1} parent=1 // pred_check
      _
    $region27: #{tpu_custom_call.1} parent=1 // pred_check_branch
      %57 = sbr.rel (0) target = $region29
    $region28: #{tpu_custom_call.1} parent=1 // pred_region
      %58 = dma.done [#allocation6], 6912
    $region29: #{tpu_custom_call.1} parent=1 // pred_fallthru
      _
    // Predicated region
    $region30: #{tpu_custom_call.1} parent=1 // pred_check
      _
    $region31: #{tpu_custom_call.1} parent=1 // pred_check_branch
      %60 = sbr.rel (0) target = $region33
    $region32: #{tpu_custom_call.1} parent=1 // pred_region
      %61 = dma.done [#allocation6], 2048
    $region33: #{tpu_custom_call.1} parent=1 // pred_fallthru
      _
    %v62 = vld [vmem:[#allocation2] sm:$0xff]
    %v63 = vld [vmem:[#allocation2 + $0x8] sm:$0xff]
    %v64 = vld [vmem:[#allocation2 + $0x10] sm:$0xff]
    %v65 = vld [vmem:[#allocation2 + $0x18] sm:$0xff]
    %v66 = vld [vmem:[#allocation2 + $0x20] sm:$0xff]
    %v67 = vld [vmem:[#allocation2 + $0x28] sm:$0xff]
    %v68 = vld [vmem:[#allocation2 + $0x30] sm:$0xff]
    %v69 = vld [vmem:[#allocation2 + $0x38] sm:$0xff]
    %v70 = vld [vmem:[#allocation5] sm:$0xff]
    %v71 = vld [vmem:[#allocation5 + $0x8] sm:$0xff]
    %v72 = vld [vmem:[#allocation5 + $0x10] sm:$0xff]
    %v73 = vld [vmem:[#allocation5 + $0x18] sm:$0xff]
    %v74 = vld [vmem:[#allocation5 + $0x20] sm:$0xff]
    %v75 = vld [vmem:[#allocation5 + $0x28] sm:$0xff]
    %v76 = vld [vmem:[#allocation5 + $0x30] sm:$0xff]
    %v77 = vld [vmem:[#allocation5 + $0x38] sm:$0xff]
    %v78 = vld [vmem:[#allocation5 + $0x40] sm:$0xff]
    %v79 = vld [vmem:[#allocation5 + $0x48] sm:$0xff]
    %v80 = vld [vmem:[#allocation5 + $0x50] sm:$0xff]
    %v81 = vld [vmem:[#allocation5 + $0x58] sm:$0xff]
    %v82 = vld [vmem:[#allocation5 + $0x60] sm:$0xff]
    %v83 = vld [vmem:[#allocation5 + $0x68] sm:$0xff]
    %v84 = vld [vmem:[#allocation5 + $0x70] sm:$0xff]
    %v85 = vld [vmem:[#allocation5 + $0x78] sm:$0xff]
    %v86 = vld [vmem:[#allocation5 + $0x80] sm:$0xff]
    %v87 = vld [vmem:[#allocation5 + $0x88] sm:$0xff]
    %v88 = vld [vmem:[#allocation5 + $0x90] sm:$0xff]
    %v89 = vld [vmem:[#allocation5 + $0x98] sm:$0xff]
    %v90 = vld [vmem:[#allocation5 + $0xa0] sm:$0xff]
    %v91 = vld [vmem:[#allocation5 + $0xa8] sm:$0xff]
    %v92 = vld [vmem:[#allocation5 + $0xb0] sm:$0xff]
    %v93 = vld [vmem:[#allocation5 + $0xb8] sm:$0xff]
    %v94 = vld [vmem:[#allocation5 + $0xc0] sm:$0xff]
    %v95 = vld [vmem:[#allocation5 + $0xc8] sm:$0xff]
    %v96 = vld [vmem:[#allocation5 + $0xd0] sm:$0xff]
    %v97 = vld [vmem:[#allocation5 + $0xd8] sm:$0xff]
    %v98 = vld [vmem:[#allocation5 + $0xe0] sm:$0xff]
    %v99 = vld [vmem:[#allocation5 + $0xe8] sm:$0xff]
    %v100 = vld [vmem:[#allocation5 + $0xf0] sm:$0xff]
    %v101 = vld [vmem:[#allocation5 + $0xf8] sm:$0xff]
    %v102 = vld [vmem:[#allocation5 + $0x100] sm:$0xff]
    %v103 = vld [vmem:[#allocation5 + $0x108] sm:$0xff]
    %v104 = vld [vmem:[#allocation5 + $0x110] sm:$0xff]
    %v105 = vld [vmem:[#allocation5 + $0x118] sm:$0xff]
    %v106 = vld [vmem:[#allocation5 + $0x120] sm:$0xff]
    %v107 = vld [vmem:[#allocation5 + $0x128] sm:$0xff]
    %v108 = vld [vmem:[#allocation5 + $0x130] sm:$0xff]
    %v109 = vld [vmem:[#allocation5 + $0x138] sm:$0xff]
    %v110 = vld [vmem:[#allocation5 + $0x140] sm:$0xff]
    %v111 = vld [vmem:[#allocation5 + $0x148] sm:$0xff]
    %v112 = vld [vmem:[#allocation5 + $0x150] sm:$0xff]
    %v113 = vld [vmem:[#allocation5 + $0x158] sm:$0xff]
    %v114 = vld [vmem:[#allocation5 + $0x160] sm:$0xff]
    %v115 = vld [vmem:[#allocation5 + $0x168] sm:$0xff]
    %v116 = vld [vmem:[#allocation5 + $0x170] sm:$0xff]
    %v117 = vld [vmem:[#allocation5 + $0x178] sm:$0xff]
    %v118 = vld [vmem:[#allocation5 + $0x180] sm:$0xff]
    %v119 = vld [vmem:[#allocation5 + $0x188] sm:$0xff]
    %v120 = vld [vmem:[#allocation5 + $0x190] sm:$0xff]
    %v121 = vld [vmem:[#allocation5 + $0x198] sm:$0xff]
    %v122 = vld [vmem:[#allocation5 + $0x1a0] sm:$0xff]
    %v123 = vld [vmem:[#allocation5 + $0x1a8] sm:$0xff]
    %vm124 = vcmask 719872
    %v126 = vsel %vm124, %v63, 0
    %v129 = vsel %vm124, %v65, 0
    %v132 = vsel %vm124, %v67, 0
    %v135 = vsel %vm124, %v69, 0
    %137 = vmatprep.subr.mxu0 %v101
    %138 = vmatpush1.msra.mxu0 %v100
    %139 = vmatprep.subr.mxu0 %v99
    %140 = vmatpush1.msra.mxu0 %v98
    %141 = vmatprep.subr.mxu0 %v97
    %142 = vmatpush1.msra.mxu0 %v96
    %143 = vmatprep.subr.mxu0 %v95
    %144 = vmatpush1.msra.mxu0 %v94
    %145 = vmatprep.subr.mxu0 %v93
    %146 = vmatpush1.msra.mxu0 %v92
    %147 = vmatprep.subr.mxu0 %v91
    %148 = vmatpush1.msra.mxu0 %v90
    %149 = vmatprep.subr.mxu0 %v89
    %150 = vmatpush1.msra.mxu0 %v88
    %151 = vmatprep.subr.mxu0 %v87
    %152 = vmatpush1.msra.mxu0 %v86
    %153 = vmatprep.subr.mxu0 %v85
    %154 = vmatpush1.msra.mxu0 %v84
    %155 = vmatprep.subr.mxu0 %v83
    %156 = vmatpush1.msra.mxu0 %v82
    %157 = vmatprep.subr.mxu0 %v81
    %158 = vmatpush1.msra.mxu0 %v80
    %159 = vmatprep.subr.mxu0 %v79
    %160 = vmatpush1.msra.mxu0 %v78
    %161 = vmatprep.subr.mxu0 %v77
    %162 = vmatpush1.msra.mxu0 %v76
    %163 = vmatprep.subr.mxu0 %v75
    %164 = vmatpush1.msra.mxu0 %v74
    %165 = vmatprep.subr.mxu0 %v73
    %166 = vmatpush1.msra.mxu0 %v72
    %167 = vmatprep.subr.mxu0 %v71
    %168 = vmatpush1.msra.mxu0 %v70
    %169 = vmatprep.subr.mxu0 0.0
    %170 = vmatpush2.msra.mxu0 0.0
    %171 = vmatprep.subr.mxu0 0.0
    %172 = vmatpush2.msra.mxu0 0.0
    %173 = vmatprep.subr.mxu0 0.0
    %174 = vmatpush2.msra.mxu0 0.0
    %175 = vmatprep.subr.mxu0 0.0
    %176 = vmatpush2.msra.mxu0 0.0
    %177 = vmatprep.subr.mxu0 0.0
    %178 = vmatpush2.msra.mxu0 0.0
    %179 = vmatprep.subr.mxu0 %v123
    %180 = vmatpush2.msra.mxu0 %v122
    %181 = vmatprep.subr.mxu0 %v121
    %182 = vmatpush2.msra.mxu0 %v120
    %183 = vmatprep.subr.mxu0 %v119
    %184 = vmatpush2.msra.mxu0 %v118
    %185 = vmatprep.subr.mxu0 %v117
    %186 = vmatpush2.msra.mxu0 %v116
    %187 = vmatprep.subr.mxu0 %v115
    %188 = vmatpush2.msra.mxu0 %v114
    %189 = vmatprep.subr.mxu0 %v113
    %190 = vmatpush2.msra.mxu0 %v112
    %191 = vmatprep.subr.mxu0 %v111
    %192 = vmatpush2.msra.mxu0 %v110
    %193 = vmatprep.subr.mxu0 %v109
    %194 = vmatpush2.msra.mxu0 %v108
    %195 = vmatprep.subr.mxu0 %v107
    %196 = vmatpush2.msra.mxu0 %v106
    %197 = vmatprep.subr.mxu0 %v105
    %198 = vmatpush2.msra.mxu0 %v104
    %199 = vmatprep.subr.mxu0 %v103
    %200 = vmatpush2.msra.mxu0 %v102
    %201 = vmatprep.mubr.f32.mxu0 %v126
    %202 = vmatmul.mubr.f32.gmra.mxu0 %v62
    %v203 = vpop.f32.mrf.mxu0
    %v204 = vadd.f32 0.0, %v203
    %v205 = vpop.f32.mrf.mxu0
    %v206 = vadd.f32 0.0, %v205
    %207 = vmatprep.mubr.f32.mxu0 %v129
    %208 = vmatmul.mubr.f32.gmra.mxu0 %v64
    %v209 = vpop.f32.mrf.mxu0
    %v210 = vadd.f32 0.0, %v209
    %v211 = vpop.f32.mrf.mxu0
    %v212 = vadd.f32 0.0, %v211
    %213 = vmatprep.mubr.f32.mxu0 %v132
    %214 = vmatmul.mubr.f32.gmra.mxu0 %v66
    %v215 = vpop.f32.mrf.mxu0
    %v216 = vadd.f32 0.0, %v215
    %v217 = vpop.f32.mrf.mxu0
    %v218 = vadd.f32 0.0, %v217
    %219 = vmatprep.mubr.f32.mxu0 %v135
    %220 = vmatmul.mubr.f32.gmra.mxu0 %v68
    %v221 = vpop.f32.mrf.mxu0
    %v222 = vadd.f32 0.0, %v221
    %v223 = vpop.f32.mrf.mxu0
    %v224 = vadd.f32 0.0, %v223
    %225 = vdwg.mxu0
    %v226 = vadd.f32 %v204, %v210
    %v227 = vadd.f32 %v226, %v216
    %v228 = vadd.f32 %v227, %v222
    %v229 = vrot.slane %v228, 4
    %v230 = vadd.f32 %v228, %v229
    %v231 = vrot.slane %v230, 2
    %v232 = vadd.f32 %v230, %v231
    %v233 = vrot.slane %v232, 1
    %v234 = vadd.f32 %v232, %v233
    %v235 = vld [vmem:[#allocation7] sm:$0xff]
    %v236 = vld [vmem:[#allocation7 + $0x8] sm:$0xff]
    %v237 = vld [vmem:[#allocation7 + $0x10] sm:$0xff]
    %v238 = vld [vmem:[#allocation7 + $0x18] sm:$0xff]
    %v239 = vld [vmem:[#allocation7 + $0x20] sm:$0xff]
    %v240 = vld [vmem:[#allocation7 + $0x28] sm:$0xff]
    %v241 = vld [vmem:[#allocation7 + $0x30] sm:$0xff]
    %v242 = vld [vmem:[#allocation7 + $0x38] sm:$0xff]
    %v243 = vld [vmem:[#allocation7 + $0x40] sm:$0xff]
    %v244 = vld [vmem:[#allocation7 + $0x48] sm:$0xff]
    %v245 = vld [vmem:[#allocation7 + $0x50] sm:$0xff]
    %v246 = vld [vmem:[#allocation7 + $0x58] sm:$0xff]
    %v247 = vld [vmem:[#allocation7 + $0x60] sm:$0xff]
    %v248 = vld [vmem:[#allocation7 + $0x68] sm:$0xff]
    %v249 = vld [vmem:[#allocation7 + $0x70] sm:$0xff]
    %v250 = vld [vmem:[#allocation7 + $0x78] sm:$0xff]
    %251 = vmatprep.subr.mxu0 0.0
    %252 = vmatpush1.msra.mxu0 %v250
    %253 = vmatprep.subr.mxu0 0.0
    %254 = vmatpush1.msra.mxu0 %v249
    %255 = vmatprep.subr.mxu0 0.0
    %256 = vmatpush1.msra.mxu0 %v248
    %257 = vmatprep.subr.mxu0 0.0
    %258 = vmatpush1.msra.mxu0 %v247
    %259 = vmatprep.subr.mxu0 0.0
    %260 = vmatpush1.msra.mxu0 %v246
    %261 = vmatprep.subr.mxu0 0.0
    %262 = vmatpush1.msra.mxu0 %v245
    %263 = vmatprep.subr.mxu0 0.0
    %264 = vmatpush1.msra.mxu0 %v244
    %265 = vmatprep.subr.mxu0 0.0
    %266 = vmatpush1.msra.mxu0 %v243
    %267 = vmatprep.subr.mxu0 0.0
    %268 = vmatpush1.msra.mxu0 %v242
    %269 = vmatprep.subr.mxu0 0.0
    %270 = vmatpush1.msra.mxu0 %v241
    %271 = vmatprep.subr.mxu0 0.0
    %272 = vmatpush1.msra.mxu0 %v240
    %273 = vmatprep.subr.mxu0 0.0
    %274 = vmatpush1.msra.mxu0 %v239
    %275 = vmatprep.subr.mxu0 0.0
    %276 = vmatpush1.msra.mxu0 %v238
    %277 = vmatprep.subr.mxu0 0.0
    %278 = vmatpush1.msra.mxu0 %v237
    %279 = vmatprep.subr.mxu0 0.0
    %280 = vmatpush1.msra.mxu0 %v236
    %281 = vmatprep.subr.mxu0 0.0
    %282 = vmatpush1.msra.mxu0 %v235
    %283 = vmatprep.subr.mxu0 0.0
    %284 = vmatpush2.msra.mxu0 0.0
    %285 = vmatprep.subr.mxu0 0.0
    %286 = vmatpush2.msra.mxu0 0.0
    %287 = vmatprep.subr.mxu0 0.0
    %288 = vmatpush2.msra.mxu0 0.0
    %289 = vmatprep.subr.mxu0 0.0
    %290 = vmatpush2.msra.mxu0 0.0
    %291 = vmatprep.subr.mxu0 0.0
    %292 = vmatpush2.msra.mxu0 0.0
    %293 = vmatprep.subr.mxu0 0.0
    %294 = vmatpush2.msra.mxu0 0.0
    %295 = vmatprep.subr.mxu0 0.0
    %296 = vmatpush2.msra.mxu0 0.0
    %297 = vmatprep.subr.mxu0 0.0
    %298 = vmatpush2.msra.mxu0 0.0
    %299 = vmatprep.subr.mxu0 0.0
    %300 = vmatpush2.msra.mxu0 0.0
    %301 = vmatprep.subr.mxu0 0.0
    %302 = vmatpush2.msra.mxu0 0.0
    %303 = vmatprep.subr.mxu0 0.0
    %304 = vmatpush2.msra.mxu0 0.0
    %305 = vmatprep.subr.mxu0 0.0
    %306 = vmatpush2.msra.mxu0 0.0
    %307 = vmatprep.subr.mxu0 0.0
    %308 = vmatpush2.msra.mxu0 0.0
    %309 = vmatprep.subr.mxu0 0.0
    %310 = vmatpush2.msra.mxu0 0.0
    %311 = vmatprep.subr.mxu0 0.0
    %312 = vmatpush2.msra.mxu0 0.0
    %313 = vmatprep.subr.mxu0 0.0
    %314 = vmatpush2.msra.mxu0 0.0
    %315 = vmatprep.mubr.f32.mxu0 0.0
    %316 = vmatmul.mubr.f32.gmra.mxu0 %v234
    %v317 = vpop.f32.mrf.mxu0
    %v318 = vadd.f32 0.0, %v317
    %v319 = vpop.f32.mrf.mxu0
    %320 = vdwg.mxu0
    %v321 = vmul.f32 %v318, 0.001953125
    %v322 = vlaneseq
    %v323 = vshrl.u32 %v322, 7
    %v324 = vsub.s32 0, %v323
    %v325 = vrot.slane %v321, %v324
    %v326 = vsub.f32 %v204, %v325
    %v327 = vsub.f32 %v210, %v325
    %v328 = vsub.f32 %v216, %v325
    %v329 = vsub.f32 %v222, %v325
    %v330 = vmul.f32 %v326, %v326
    %v331 = vmul.f32 %v327, %v327
    %v332 = vmul.f32 %v328, %v328
    %v333 = vmul.f32 %v329, %v329
    %v334 = vadd.f32 %v330, %v331
    %v335 = vadd.f32 %v334, %v332
    %v336 = vadd.f32 %v335, %v333
    %v337 = vrot.slane %v336, 4
    %v338 = vadd.f32 %v336, %v337
    %v339 = vrot.slane %v338, 2
    %v340 = vadd.f32 %v338, %v339
    %v341 = vrot.slane %v340, 1
    %v342 = vadd.f32 %v340, %v341
    %343 = vmatprep.subr.mxu0 0.0
    %344 = vmatpush1.msra.mxu0 %v250
    %345 = vmatprep.subr.mxu0 0.0
    %346 = vmatpush1.msra.mxu0 %v249
    %347 = vmatprep.subr.mxu0 0.0
    %348 = vmatpush1.msra.mxu0 %v248
    %349 = vmatprep.subr.mxu0 0.0
    %350 = vmatpush1.msra.mxu0 %v247
    %351 = vmatprep.subr.mxu0 0.0
    %352 = vmatpush1.msra.mxu0 %v246
    %353 = vmatprep.subr.mxu0 0.0
    %354 = vmatpush1.msra.mxu0 %v245
    %355 = vmatprep.subr.mxu0 0.0
    %356 = vmatpush1.msra.mxu0 %v244
    %357 = vmatprep.subr.mxu0 0.0
    %358 = vmatpush1.msra.mxu0 %v243
    %359 = vmatprep.subr.mxu0 0.0
    %360 = vmatpush1.msra.mxu0 %v242
    %361 = vmatprep.subr.mxu0 0.0
    %362 = vmatpush1.msra.mxu0 %v241
    %363 = vmatprep.subr.mxu0 0.0
    %364 = vmatpush1.msra.mxu0 %v240
    %365 = vmatprep.subr.mxu0 0.0
    %366 = vmatpush1.msra.mxu0 %v239
    %367 = vmatprep.subr.mxu0 0.0
    %368 = vmatpush1.msra.mxu0 %v238
    %369 = vmatprep.subr.mxu0 0.0
    %370 = vmatpush1.msra.mxu0 %v237
    %371 = vmatprep.subr.mxu0 0.0
    %372 = vmatpush1.msra.mxu0 %v236
    %373 = vmatprep.subr.mxu0 0.0
    %374 = vmatpush1.msra.mxu0 %v235
    %375 = vmatprep.subr.mxu0 0.0
    %376 = vmatpush2.msra.mxu0 0.0
    %377 = vmatprep.subr.mxu0 0.0
    %378 = vmatpush2.msra.mxu0 0.0
    %379 = vmatprep.subr.mxu0 0.0
    %380 = vmatpush2.msra.mxu0 0.0
    %381 = vmatprep.subr.mxu0 0.0
    %382 = vmatpush2.msra.mxu0 0.0
    %383 = vmatprep.subr.mxu0 0.0
    %384 = vmatpush2.msra.mxu0 0.0
    %385 = vmatprep.subr.mxu0 0.0
    %386 = vmatpush2.msra.mxu0 0.0
    %387 = vmatprep.subr.mxu0 0.0
    %388 = vmatpush2.msra.mxu0 0.0
    %389 = vmatprep.subr.mxu0 0.0
    %390 = vmatpush2.msra.mxu0 0.0
    %391 = vmatprep.subr.mxu0 0.0
    %392 = vmatpush2.msra.mxu0 0.0
    %393 = vmatprep.subr.mxu0 0.0
    %394 = vmatpush2.msra.mxu0 0.0
    %395 = vmatprep.subr.mxu0 0.0
    %396 = vmatpush2.msra.mxu0 0.0
    %397 = vmatprep.subr.mxu0 0.0
    %398 = vmatpush2.msra.mxu0 0.0
    %399 = vmatprep.subr.mxu0 0.0
    %400 = vmatpush2.msra.mxu0 0.0
    %401 = vmatprep.subr.mxu0 0.0
    %402 = vmatpush2.msra.mxu0 0.0
    %403 = vmatprep.subr.mxu0 0.0
    %404 = vmatpush2.msra.mxu0 0.0
    %405 = vmatprep.subr.mxu0 0.0
    %406 = vmatpush2.msra.mxu0 0.0
    %407 = vmatprep.mubr.f32.mxu0 0.0
    %408 = vmatmul.mubr.f32.gmra.mxu0 %v342
    %v409 = vpop.f32.mrf.mxu0
    %v410 = vadd.f32 0.0, %v409
    %v411 = vpop.f32.mrf.mxu0
    %412 = vdwg.mxu0
    %v413 = vmul.f32 %v410, 0.001953125
    %v414 = vadd.f32 %v413, 1e-05
    %v415 = vrsqrt.pop %v414
    %v416 = vld [vmem:[%s3] sm:$0x1]
    %v417 = vmul.f32 %v415, %v416
    %v418 = vld [vmem:[%s4] sm:$0x1]
    %v419 = vmul.f32 %v321, %v417
    %v420 = vsub.f32 %v418, %v419
    %v421 = vlaneseq
    %v422 = vshrl.u32 %v421, 7
    %v423 = vsub.s32 0, %v422
    %v424 = vrot.slane %v417, %v423
    %v425 = vmul.f32 %v204, %v424
    %v426 = vmul.f32 %v210, %v424
    %v427 = vmul.f32 %v216, %v424
    %v428 = vmul.f32 %v222, %v424
    %v430 = vlaneseq
    %v431 = vshrl.u32 %v430, 7
    %v432 = vsub.s32 0, %v431
    %v433 = vrot.slane %v420, %v432
    %v435 = vadd.f32 %v425, %v433
    %v436 = vadd.f32 %v426, %v433
    %v437 = vadd.f32 %v427, %v433
    %v438 = vadd.f32 %v428, %v433
    %v439 = vmax.f32 %v435, 0.0
    %v440 = vmax.f32 %v436, 0.0
    %v441 = vmax.f32 %v437, 0.0
    %v442 = vmax.f32 %v438, 0.0
    %v443 = vadd.f32 %v439, %v206
    %v444 = vadd.f32 %v440, %v212
    %v445 = vadd.f32 %v441, %v218
    %v446 = vadd.f32 %v442, %v224
    %447 = vst [vmem:[#allocation8] sm:$0xff] %v443
    %448 = vst [vmem:[#allocation8 + $0x8] sm:$0xff] %v444
    %449 = vst [vmem:[#allocation8 + $0x10] sm:$0xff] %v445
    %450 = vst [vmem:[#allocation8 + $0x18] sm:$0xff] %v446
    // Predicated region
    $region34: #{tpu_custom_call.1} parent=1 // pred_check
      _
    $region35: #{tpu_custom_call.1} parent=1 // pred_check_branch
      %452 = sbr.rel (0) target = $region37
    $region36: #{tpu_custom_call.1} parent=1 // pred_region
      %s454 = ssub.s32 512, 512
      %455 = vsyncadd [#allocation4], %s454
      %s456 = sshll.u32 [#allocation8], 4
      %s457 = int_to_ptr.vmem [resolvable:$true] %s456
      %462 = dma.vmem_to_hbm [thread:$0]  %s457, 512, %s5, [#allocation4], 128, 128, 8
    $region37: #{tpu_custom_call.1} parent=1 // pred_fallthru
      _
    // Predicated region
    $region38: #{tpu_custom_call.1} parent=1 // pred_check
      _
    $region39: #{tpu_custom_call.1} parent=1 // pred_check_branch
      %464 = sbr.rel (0) target = $region41
    $region40: #{tpu_custom_call.1} parent=1 // pred_region
      %465 = dma.done [#allocation4], 512
    $region41: #{tpu_custom_call.1} parent=1 // pred_fallthru
      _
    %466 = vsyncpa [#allocation3], 1
    %467 = vsyncpa [#allocation6], 1
    %468 = vsyncpa [#allocation4], 1

</llo_original>
